<compile_context>
chip_gen: v5e
topology: v5e:2x2
jax: 0.10.0
libtpu: 0.0.40
codegen_flags: <defaults>
</compile_context>

<pallas_src>
import jax
import jax.numpy as jnp
from jax.experimental import pallas as pl
from jax.experimental.pallas import tpu as pltpu


def _mlp_kernel(x_ref, w1_ref, b1_ref, w2_ref, b2_ref, w3_ref, b3_ref, o_ref):
    w1 = w1_ref[...]
    w2 = w2_ref[...]
    w3 = w3_ref[...]
    mm_dtype = w1.dtype  # bf16 (default) or f32; MXU operand dtype

    # fc1 + ReLU  (f32 accumulation on the MXU, f32 epilogue)
    h1 = jnp.dot(x_ref[...].astype(mm_dtype), w1,
                 preferred_element_type=jnp.float32)
    h1 = jnp.maximum(h1 + b1_ref[...], 0.0)

    # fc2 + ReLU
    h2 = jnp.dot(h1.astype(mm_dtype), w2,
                 preferred_element_type=jnp.float32)
    h2 = jnp.maximum(h2 + b2_ref[...], 0.0)

    # fc3 (no activation) -> narrow (TB, action_dim) store: minimal writeback
    q = jnp.dot(h2.astype(mm_dtype), w3,
                preferred_element_type=jnp.float32)
    o_ref[...] = (q + b3_ref[...]).astype(o_ref.dtype)


def init_params(key, state_dim, action_dim, hidden_size):
    """PyTorch nn.Linear default init (U[-1/sqrt(fan_in), +1/sqrt(fan_in)]);
    weights kept as (in, out) so the kernel computes x @ W + b."""
    ks = jax.random.split(key, 6)

    def lin(kw, kb, fan_in, fan_out):
        bound = 1.0 / jnp.sqrt(jnp.float32(fan_in))
        w = jax.random.uniform(kw, (fan_in, fan_out), jnp.float32, -bound, bound)
        b = jax.random.uniform(kb, (1, fan_out), jnp.float32, -bound, bound)
        return w, b

    w1, b1 = lin(ks[0], ks[1], state_dim, hidden_size)
    w2, b2 = lin(ks[2], ks[3], hidden_size, hidden_size)
    w3, b3 = lin(ks[4], ks[5], hidden_size, action_dim)
    return {"w1": w1, "b1": b1, "w2": w2, "b2": b2, "w3": w3, "b3": b3}


def prepare_params(params, *, matmul_dtype=jnp.bfloat16):
    """One-time param prep: cast weights to the MXU operand dtype (bf16 by
    default on all generations; f32 reserved for verification).  Biases stay
    f32 (the bias/ReLU epilogue runs in f32).  No output-column padding --
    the kernel emits the narrow (B, action_dim) result directly."""
    return {
        "w1": params["w1"].astype(matmul_dtype),
        "b1": params["b1"].astype(jnp.float32),
        "w2": params["w2"].astype(matmul_dtype),
        "b2": params["b2"].astype(jnp.float32),
        "w3": params["w3"].astype(matmul_dtype),
        "b3": params["b3"].astype(jnp.float32),
    }


def _round_up(x, m):
    return ((x + m - 1) // m) * m


# Below this batch, splitting the grid for v7x's two TensorCores costs more in
# per-step pipeline overhead (~0.35 us/step) than it recovers.
_MEGACORE_MIN_BATCH = 1024


def _plan_batch_tiles(B, block_b):
    """Pick (tile_rows, num_tiles) for the batch grid.

    - small/medium B: one full-extent block (no padding, no masked tail).
    - large B: >= 2 tiles of round8(ceil(B/n)) rows so both v7x TensorCores get
      work; the last tile may extend past B -- Pallas drops the out-of-range
      store rows, so no jnp.pad / slice passes are needed.
    """
    assert block_b % 8 == 0 and block_b >= 8
    if B <= block_b and B < _MEGACORE_MIN_BATCH:
        return B, 1
    n_tiles = max(-(-B // block_b), 2)          # >= 2 grid steps for megacore
    tb = _round_up(-(-B // n_tiles), 8)         # valid sublane tile (8-multiple)
    return tb, -(-B // tb)


def dqfd_forward(state, kparams, *, block_b=4096):
    """Fused MLP forward.  state: (B, state_dim) f32 -> (B, action_dim) f32.

    The batch is tiled into blocks of ~`block_b` rows; weights/biases stay
    VMEM-resident across tiles via constant index_maps.  Live VMEM per tile is
    ~TB x 3.5 KiB, so the default block_b=4096 (~14 MiB) fits the default
    scoped-VMEM limit on v5e/v6e/v7x.  Raise vmem_limit_bytes before pushing
    block_b past ~8192 on v7x.
    """
    B, S = state.shape
    H = kparams["w1"].shape[1]
    A = kparams["w3"].shape[1]
    TB, n_tiles = _plan_batch_tiles(B, block_b)

    fixed = lambda shape: pl.BlockSpec(shape, lambda i: (0, 0))

    return pl.pallas_call(
        _mlp_kernel,
        out_shape=jax.ShapeDtypeStruct((B, A), jnp.float32),
        grid=(n_tiles,),
        in_specs=[
            pl.BlockSpec((TB, S), lambda i: (i, 0)),   # state: tiled over batch
            fixed((S, H)), fixed((1, H)),              # fc1 (VMEM-resident)
            fixed((H, H)), fixed((1, H)),              # fc2
            fixed((H, A)), fixed((1, A)),              # fc3 (narrow, unpadded)
        ],
        out_specs=pl.BlockSpec((TB, A), lambda i: (i, 0)),  # narrow writeback
        compiler_params=pltpu.CompilerParams(
            dimension_semantics=("parallel",)),        # megacore-shard the batch
    )(state, kparams["w1"], kparams["b1"], kparams["w2"], kparams["b2"],
      kparams["w3"], kparams["b3"])


def reference_forward(state, p):
    h1 = jnp.maximum(state @ p["w1"] + p["b1"], 0.0)
    h2 = jnp.maximum(h1 @ p["w2"] + p["b2"], 0.0)
    return h2 @ p["w3"] + p["b3"]


if __name__ == "__main__":
    # Small shapes consistent with a DQfD agent (CartPole-like):
    batch, state_dim, action_dim, hidden_size = 8, 4, 2, 32

    key = jax.random.PRNGKey(0)
    k_x, k_p, k_x2 = jax.random.split(key, 3)
    state = jax.random.normal(k_x, (batch, state_dim), dtype=jnp.float32)
    params = init_params(k_p, state_dim, action_dim, hidden_size)
    q_ref = reference_forward(state, params)

    # f32 matmul path: must match the pure-JAX reference tightly (not bit-exact:
    # MXU f32 accumulation order differs from XLA's).
    kp_f32 = prepare_params(params, matmul_dtype=jnp.float32)
    q_f32 = jax.block_until_ready(dqfd_forward(state, kp_f32))
    assert q_f32.shape == (batch, action_dim)
    assert jnp.allclose(q_f32, q_ref, atol=1e-5, rtol=1e-5), "f32 mismatch"

    # bf16 MXU-operand path (default): looser tolerance vs the f32 reference
    # (activations are ReLU'd in f32 then re-cast to bf16 before fc2/fc3).
    kp_bf16 = prepare_params(params)  # matmul_dtype=bfloat16 default
    q_bf16 = jax.block_until_ready(dqfd_forward(state, kp_bf16))
    assert q_bf16.shape == (batch, action_dim)
    assert jnp.allclose(q_bf16, q_ref, atol=5e-2, rtol=5e-2), "bf16 mismatch"

    # Larger ragged batch exercises the multi-tile grid (>=2 steps for v7x
    # megacore) and the masked boundary tile (no jnp.pad, no output slice).
    big_b = 1029
    state_big = jax.random.normal(k_x2, (big_b, state_dim), dtype=jnp.float32)
    q_big = jax.block_until_ready(dqfd_forward(state_big, kp_f32))
    q_big_ref = reference_forward(state_big, params)
    assert q_big.shape == (big_b, action_dim)
    assert jnp.allclose(q_big, q_big_ref, atol=1e-4, rtol=1e-4), "big-batch mismatch"

    print("KERNEL_OK")
</pallas_src>

<mosaic_0001>
module attributes {stable_mosaic.version = 11 : i64} {
  func.func @_mlp_kernel(%arg0: i32, %arg1: memref<8x4xf32, #tpu.memory_space<vmem>>, %arg2: memref<4x32xf32, #tpu.memory_space<vmem>>, %arg3: memref<1x32xf32, #tpu.memory_space<vmem>>, %arg4: memref<32x32xf32, #tpu.memory_space<vmem>>, %arg5: memref<1x32xf32, #tpu.memory_space<vmem>>, %arg6: memref<32x2xf32, #tpu.memory_space<vmem>>, %arg7: memref<1x2xf32, #tpu.memory_space<vmem>>, %arg8: memref<8x2xf32, #tpu.memory_space<vmem>>) attributes {dimension_semantics = [#tpu.dimension_semantics<parallel>], iteration_bounds = array<i64: 1>, scalar_prefetch = 0 : i64, scratch_operands = 0 : i64, tpu.core_type = #tpu.core_type<tc>, window_params = [{transform_indices = @transform_0, window_bounds = array<i64: 8, 4>}, {pipeline_mode = #tpu.pipeline_mode<synchronous>, transform_indices = @transform_1, window_bounds = array<i64: 4, 32>}, {pipeline_mode = #tpu.pipeline_mode<synchronous>, transform_indices = @transform_2, window_bounds = array<i64: 1, 32>}, {pipeline_mode = #tpu.pipeline_mode<synchronous>, transform_indices = @transform_3, window_bounds = array<i64: 32, 32>}, {pipeline_mode = #tpu.pipeline_mode<synchronous>, transform_indices = @transform_4, window_bounds = array<i64: 1, 32>}, {pipeline_mode = #tpu.pipeline_mode<synchronous>, transform_indices = @transform_5, window_bounds = array<i64: 32, 2>}, {pipeline_mode = #tpu.pipeline_mode<synchronous>, transform_indices = @transform_6, window_bounds = array<i64: 1, 2>}, {transform_indices = @transform_7, window_bounds = array<i64: 8, 2>}]} {
    %c0 = arith.constant 0 : index
    %c0_0 = arith.constant 0 : index
    %0 = vector.load %arg2[%c0, %c0_0] : memref<4x32xf32, #tpu.memory_space<vmem>>, vector<4x32xf32>
    %c0_1 = arith.constant 0 : index
    %c0_2 = arith.constant 0 : index
    %1 = vector.load %arg4[%c0_1, %c0_2] : memref<32x32xf32, #tpu.memory_space<vmem>>, vector<32x32xf32>
    %c0_3 = arith.constant 0 : index
    %c0_4 = arith.constant 0 : index
    %2 = vector.load %arg6[%c0_3, %c0_4] : memref<32x2xf32, #tpu.memory_space<vmem>>, vector<32x2xf32>
    %c0_5 = arith.constant 0 : index
    %c0_6 = arith.constant 0 : index
    %3 = vector.load %arg1[%c0_5, %c0_6] : memref<8x4xf32, #tpu.memory_space<vmem>>, vector<8x4xf32>
    %cst = arith.constant dense<0.000000e+00> : vector<8x32xf32>
    %4 = tpu.matmul %3, %0, %cst {dimension_numbers = #tpu.dot_dimension_numbers<[1], [0], [0], [1], [0, 0, 1, 1], [], []>} : vector<8x4xf32>, vector<4x32xf32>, vector<8x32xf32> -> vector<8x32xf32>
    %c0_7 = arith.constant 0 : index
    %c0_8 = arith.constant 0 : index
    %5 = vector.load %arg3[%c0_7, %c0_8] : memref<1x32xf32, #tpu.memory_space<vmem>>, vector<1x32xf32>
    %6 = vector.broadcast %5 : vector<1x32xf32> to vector<8x32xf32>
    %7 = arith.addf %4, %6 : vector<8x32xf32>
    %cst_9 = arith.constant 0.000000e+00 : f32
    %8 = vector.broadcast %cst_9 : f32 to vector<8x32xf32>
    %9 = arith.maximumf %7, %8 : vector<8x32xf32>
    %cst_10 = arith.constant dense<0.000000e+00> : vector<8x32xf32>
    %10 = tpu.matmul %9, %1, %cst_10 {dimension_numbers = #tpu.dot_dimension_numbers<[1], [0], [0], [1], [0, 0, 1, 1], [], []>} : vector<8x32xf32>, vector<32x32xf32>, vector<8x32xf32> -> vector<8x32xf32>
    %c0_11 = arith.constant 0 : index
    %c0_12 = arith.constant 0 : index
    %11 = vector.load %arg5[%c0_11, %c0_12] : memref<1x32xf32, #tpu.memory_space<vmem>>, vector<1x32xf32>
    %12 = vector.broadcast %11 : vector<1x32xf32> to vector<8x32xf32>
    %13 = arith.addf %10, %12 : vector<8x32xf32>
    %cst_13 = arith.constant 0.000000e+00 : f32
    %14 = vector.broadcast %cst_13 : f32 to vector<8x32xf32>
    %15 = arith.maximumf %13, %14 : vector<8x32xf32>
    %cst_14 = arith.constant dense<0.000000e+00> : vector<8x2xf32>
    %16 = tpu.matmul %15, %2, %cst_14 {dimension_numbers = #tpu.dot_dimension_numbers<[1], [0], [0], [1], [0, 0, 1, 1], [], []>} : vector<8x32xf32>, vector<32x2xf32>, vector<8x2xf32> -> vector<8x2xf32>
    %c0_15 = arith.constant 0 : index
    %c0_16 = arith.constant 0 : index
    %17 = vector.load %arg7[%c0_15, %c0_16] : memref<1x2xf32, #tpu.memory_space<vmem>>, vector<1x2xf32>
    %18 = vector.broadcast %17 : vector<1x2xf32> to vector<8x2xf32>
    %19 = arith.addf %16, %18 : vector<8x2xf32>
    %c0_17 = arith.constant 0 : index
    %c0_18 = arith.constant 0 : index
    %20 = vector.load %arg8[%c0_17, %c0_18] : memref<8x2xf32, #tpu.memory_space<vmem>>, vector<8x2xf32>
    tpu.vector_store %arg8[%c0_17, %c0_18], %19 {strides = array<i32>} : memref<8x2xf32, #tpu.memory_space<vmem>>, vector<8x2xf32>,
    return
  }
  func.func @transform_0(%arg0: i32) -> (i32, i32) {
    %c0_i32 = arith.constant 0 : i32
    %c0_i32_0 = arith.constant 0 : i32
    return %arg0, %c0_i32 : i32, i32
  }
  func.func @transform_1(%arg0: i32) -> (i32, i32) {
    %c0_i32 = arith.constant 0 : i32
    %c0_i32_0 = arith.constant 0 : i32
    %c0_i32_1 = arith.constant 0 : i32
    return %c0_i32, %c0_i32_0 : i32, i32
  }
  func.func @transform_2(%arg0: i32) -> (i32, i32) {
    %c0_i32 = arith.constant 0 : i32
    %c0_i32_0 = arith.constant 0 : i32
    %c0_i32_1 = arith.constant 0 : i32
    return %c0_i32, %c0_i32_0 : i32, i32
  }
  func.func @transform_3(%arg0: i32) -> (i32, i32) {
    %c0_i32 = arith.constant 0 : i32
    %c0_i32_0 = arith.constant 0 : i32
    %c0_i32_1 = arith.constant 0 : i32
    return %c0_i32, %c0_i32_0 : i32, i32
  }
  func.func @transform_4(%arg0: i32) -> (i32, i32) {
    %c0_i32 = arith.constant 0 : i32
    %c0_i32_0 = arith.constant 0 : i32
    %c0_i32_1 = arith.constant 0 : i32
    return %c0_i32, %c0_i32_0 : i32, i32
  }
  func.func @transform_5(%arg0: i32) -> (i32, i32) {
    %c0_i32 = arith.constant 0 : i32
    %c0_i32_0 = arith.constant 0 : i32
    %c0_i32_1 = arith.constant 0 : i32
    return %c0_i32, %c0_i32_0 : i32, i32
  }
  func.func @transform_6(%arg0: i32) -> (i32, i32) {
    %c0_i32 = arith.constant 0 : i32
    %c0_i32_0 = arith.constant 0 : i32
    %c0_i32_1 = arith.constant 0 : i32
    return %c0_i32, %c0_i32_0 : i32, i32
  }
  func.func @transform_7(%arg0: i32) -> (i32, i32) {
    %c0_i32 = arith.constant 0 : i32
    %c0_i32_0 = arith.constant 0 : i32
    return %arg0, %c0_i32 : i32, i32
  }
}

</mosaic_0001>

<llo_original>
// kernel: tpu_custom_call.1
$region0: #{tpu_custom_call.1}
  #allocation0 [shape = 'u32[]', space=smem, size = 0x4, offset = 0x4, fixed_abs, tag = 'smem constant byte address 0x4 - core index']
  #allocation1 [shape = 'u32[72,128]{1,0:T(1,128)}', space=vmem, size = 0x9000, scoped, tag = 'internal scratch']
  %s0 = inlined_call_operand.vmem [shape: f32[8,4], index: 0, kind: input, shape index: {}]
  %s1 = inlined_call_operand.vmem [shape: f32[4,32], index: 1, kind: input, shape index: {}]
  %s2 = inlined_call_operand.vmem [shape: f32[1,32], index: 2, kind: input, shape index: {}]
  %s3 = inlined_call_operand.vmem [shape: f32[32,32], index: 3, kind: input, shape index: {}]
  %s4 = inlined_call_operand.vmem [shape: f32[1,32], index: 4, kind: input, shape index: {}]
  %s5 = inlined_call_operand.vmem [shape: f32[32,2], index: 5, kind: input, shape index: {}]
  %s6 = inlined_call_operand.vmem [shape: f32[1,2], index: 6, kind: input, shape index: {}]
  %s7 = inlined_call_operand.vmem [shape: f32[8,2], index: 7, kind: output, shape index: {}]
  %s8 = sld [smem:[#allocation0]]
  $region38: #{tpu_custom_call.1} parent=0
    _
  %s10 = ssub.s32 1, %s8
  %s11 = scalar_select 0, %s10, %s8
  // Predicated region
  $region2: #{tpu_custom_call.1} parent=0 // pred_check
    _
  $region3: #{tpu_custom_call.1} parent=0 // pred_check_branch
    %13 = sbr.rel (0) target = $region5
  $region4: #{tpu_custom_call.1} parent=0 // pred_region
    _
  $region5: #{tpu_custom_call.1} parent=0 // pred_fallthru
    _
  // Predicated region
  $region6: #{tpu_custom_call.1} parent=0 // pred_check
    _
  $region7: #{tpu_custom_call.1} parent=0 // pred_check_branch
    %15 = sbr.rel (0) target = $region9
  $region8: #{tpu_custom_call.1} parent=0 // pred_region
    _
  $region9: #{tpu_custom_call.1} parent=0 // pred_fallthru
    _
  // Predicated region
  $region10: #{tpu_custom_call.1} parent=0 // pred_check
    _
  $region11: #{tpu_custom_call.1} parent=0 // pred_check_branch
    %17 = sbr.rel (0) target = $region13
  $region12: #{tpu_custom_call.1} parent=0 // pred_region
    _
  $region13: #{tpu_custom_call.1} parent=0 // pred_fallthru
    _
  // Predicated region
  $region14: #{tpu_custom_call.1} parent=0 // pred_check
    _
  $region15: #{tpu_custom_call.1} parent=0 // pred_check_branch
    %19 = sbr.rel (0) target = $region17
  $region16: #{tpu_custom_call.1} parent=0 // pred_region
    _
  $region17: #{tpu_custom_call.1} parent=0 // pred_fallthru
    _
  // Predicated region
  $region18: #{tpu_custom_call.1} parent=0 // pred_check
    _
  $region19: #{tpu_custom_call.1} parent=0 // pred_check_branch
    %21 = sbr.rel (0) target = $region21
  $region20: #{tpu_custom_call.1} parent=0 // pred_region
    _
  $region21: #{tpu_custom_call.1} parent=0 // pred_fallthru
    _
  // Predicated region
  $region22: #{tpu_custom_call.1} parent=0 // pred_check
    _
  $region23: #{tpu_custom_call.1} parent=0 // pred_check_branch
    %23 = sbr.rel (0) target = $region25
  $region24: #{tpu_custom_call.1} parent=0 // pred_region
    _
  $region25: #{tpu_custom_call.1} parent=0 // pred_fallthru
    _
  // Predicated region
  $region26: #{tpu_custom_call.1} parent=0 // pred_check
    _
  $region27: #{tpu_custom_call.1} parent=0 // pred_check_branch
    %25 = sbr.rel (0) target = $region29
  $region28: #{tpu_custom_call.1} parent=0 // pred_region
    _
  $region29: #{tpu_custom_call.1} parent=0 // pred_fallthru
    _
  %v26 = vld [vmem:[%s1] sm:$0xf]
  %v27 = vld [vmem:[%s3] sm:$0xff]
  %v28 = vld [vmem:[%s3 + $0x8] sm:$0xff]
  %v29 = vld [vmem:[%s3 + $0x10] sm:$0xff]
  %v30 = vld [vmem:[%s3 + $0x18] sm:$0xff]
  %v31 = vld [vmem:[%s5] sm:$0xff]
  %v32 = vld [vmem:[%s5 + $0x8] sm:$0xff]
  %v33 = vld [vmem:[%s5 + $0x10] sm:$0xff]
  %v34 = vld [vmem:[%s5 + $0x18] sm:$0xff]
  %v35 = vld [vmem:[%s0] sm:$0xff]
  %v36 = vld [vmem:[%s2] sm:$0x1]
  %v38 = vperm.slane %v36, 0
  %vm40 = vcmask 31744
  %v42 = vsel %vm40, %v35, 0
  %vm44 = vcmask 1043456
  %v46 = vsel %vm44, %v26, 0
  %48 = vmatpush.msra.mxu0 0.0
  %49 = vmatpush.msra.mxu0 0.0
  %50 = vmatpush.msra.mxu0 0.0
  %51 = vmatpush.msra.mxu0 0.0
  %52 = vmatpush.msra.mxu0 0.0
  %53 = vmatpush.msra.mxu0 0.0
  %54 = vmatpush.msra.mxu0 0.0
  %55 = vmatpush.msra.mxu0 0.0
  %56 = vmatpush.msra.mxu0 0.0
  %57 = vmatpush.msra.mxu0 0.0
  %58 = vmatpush.msra.mxu0 0.0
  %59 = vmatpush.msra.mxu0 0.0
  %60 = vmatpush.msra.mxu0 0.0
  %61 = vmatpush.msra.mxu0 0.0
  %62 = vmatpush.msra.mxu0 0.0
  %63 = vmatpush.msra.mxu0 %v46
  %64 = vmatmul.f32.gmra.mxu0 %v42
  %v65 = vpop.f32.mrf.mxu0
  %v66 = vadd.f32 %v38, %v65
  %67 = vdwg.mxu0
  %v68 = vmax.f32 %v66, 0.0
  %v69 = vld [vmem:[%s4] sm:$0x1]
  %v71 = vperm.slane %v69, 0
  %vm73 = vcmask 261120
  %v75 = vsel %vm73, %v68, 0
  %77 = vmatpush.msra.mxu0 0.0
  %78 = vmatpush.msra.mxu0 0.0
  %79 = vmatpush.msra.mxu0 0.0
  %80 = vmatpush.msra.mxu0 0.0
  %81 = vmatpush.msra.mxu0 0.0
  %82 = vmatpush.msra.mxu0 0.0
  %83 = vmatpush.msra.mxu0 0.0
  %84 = vmatpush.msra.mxu0 0.0
  %85 = vmatpush.msra.mxu0 0.0
  %86 = vmatpush.msra.mxu0 0.0
  %87 = vmatpush.msra.mxu0 0.0
  %88 = vmatpush.msra.mxu0 0.0
  %89 = vmatpush.msra.mxu0 %v30
  %90 = vmatpush.msra.mxu0 %v29
  %91 = vmatpush.msra.mxu0 %v28
  %92 = vmatpush.msra.mxu0 %v27
  %93 = vmatmul.f32.gmra.mxu0 %v75
  %v94 = vpop.f32.mrf.mxu0
  %v95 = vadd.f32 %v71, %v94
  %96 = vdwg.mxu0
  %v97 = vmax.f32 %v95, 0.0
  %v98 = vld [vmem:[%s6] sm:$0x1]
  %v100 = vperm.slane %v98, 0
  %v103 = vsel %vm73, %v97, 0
  %105 = vmatpush.msra.mxu0 0.0
  %106 = vmatpush.msra.mxu0 0.0
  %107 = vmatpush.msra.mxu0 0.0
  %108 = vmatpush.msra.mxu0 0.0
  %109 = vmatpush.msra.mxu0 0.0
  %110 = vmatpush.msra.mxu0 0.0
  %111 = vmatpush.msra.mxu0 0.0
  %112 = vmatpush.msra.mxu0 0.0
  %113 = vmatpush.msra.mxu0 0.0
  %114 = vmatpush.msra.mxu0 0.0
  %115 = vmatpush.msra.mxu0 0.0
  %116 = vmatpush.msra.mxu0 0.0
  %117 = vmatpush.msra.mxu0 %v34
  %118 = vmatpush.msra.mxu0 %v33
  %119 = vmatpush.msra.mxu0 %v32
  %120 = vmatpush.msra.mxu0 %v31
  %121 = vmatmul.f32.gmra.mxu0 %v103
  %v122 = vpop.f32.mrf.mxu0
  %v123 = vadd.f32 %v100, %v122
  %124 = vdwg.mxu0
  %vm125 = vcmask 15360
  %126 = vst.msk [vmem:[%s7] sm:$0xff] %vm125, %v123
  // Predicated region
  $region30: #{tpu_custom_call.1} parent=0 // pred_check
    _
  $region31: #{tpu_custom_call.1} parent=0 // pred_check_branch
    %128 = sbr.rel (0) target = $region33
  $region32: #{tpu_custom_call.1} parent=0 // pred_region
    _
  $region33: #{tpu_custom_call.1} parent=0 // pred_fallthru
    _
  // Predicated region
  $region34: #{tpu_custom_call.1} parent=0 // pred_check
    _
  $region35: #{tpu_custom_call.1} parent=0 // pred_check_branch
    %130 = sbr.rel (0) target = $region37
  $region36: #{tpu_custom_call.1} parent=0 // pred_region
    _
  $region37: #{tpu_custom_call.1} parent=0 // pred_fallthru
    _

</llo_original>
